<compile_context>
chip_gen: v7x
topology: tpu7x:2x2x1
jax: 0.10.0
libtpu: 0.0.40
codegen_flags: <defaults>
</compile_context>

<pallas_src>
import jax
import jax.numpy as jnp
from jax.experimental import pallas as pl
from jax.experimental.pallas import tpu as pltpu


def _make_conv1x1_kernel(c_in: int, c_out: int):
    def kernel(w_ref, b_ref, x_ref, o_ref):
        # w_ref: (c_out, c_in) SMEM, b_ref: (c_out,) SMEM
        # x_ref: (bn, c_in, T) VMEM,  o_ref: (bn, c_out, T) VMEM
        x = x_ref[...].astype(jnp.float32)                 # (bn, c_in, T)
        planes = []
        for co in range(c_out):                            # unrolled at trace time
            acc = x[:, 0:1, :] * w_ref[co, 0]
            for ci in range(1, c_in):
                acc = acc + x[:, ci:ci + 1, :] * w_ref[co, ci]
            planes.append(acc + b_ref[co])
        # single lane-dense, full-tile store (no masked sublane stores)
        o_ref[...] = jnp.concatenate(planes, axis=1).astype(o_ref.dtype)
    return kernel


def _pick_tile_hw(hw: int, cap: int) -> int:
    """Largest lane-dense spatial tile that divides H*W (no pad, no tail)."""
    if hw <= cap:
        return hw                      # single block per row; full dim is always legal
    t = (cap // 128) * 128
    while t >= 128:
        if hw % t == 0:
            return t
        t -= 128
    return hw                          # no 128-multiple divisor <= cap: take full row


def _pick_tile_n(n: int, c_in: int, c_out: int, tile_hw: int, itemsize: int,
                 budget_bytes: int = 8 * 1024 * 1024) -> int:
    """Largest divisor of N whose double-buffered in+out blocks fit the budget."""
    per_n = 2 * (c_in + c_out) * tile_hw * itemsize   # x2 for double buffering
    max_bn = max(1, budget_bytes // max(per_n, 1))
    bn = 1
    for d in range(1, n + 1):
        if n % d == 0 and d <= max_bn:
            bn = d
    return bn


def conv2d_1x1(x_nchw: jax.Array, weight: jax.Array, bias: jax.Array,
               *, max_tile_hw: int = 8192) -> jax.Array:
    """1x1 Conv2d on NCHW input. weight: (C_out, C_in, 1, 1), bias: (C_out,)."""
    n, c_in, h, w = x_nchw.shape
    c_out = weight.shape[0]
    hw = h * w

    x3 = x_nchw.reshape(n, c_in, hw)               # free reshape (contiguous), no transpose
    w_mat = weight.reshape(c_out, c_in).astype(jnp.float32)   # scalars -> SMEM
    b_vec = bias.reshape(c_out).astype(jnp.float32)           # scalars -> SMEM

    tile_hw = _pick_tile_hw(hw, max_tile_hw)
    tile_n = _pick_tile_n(n, c_in, c_out, tile_hw, x_nchw.dtype.itemsize)
    grid = (n // tile_n, hw // tile_hw)

    out3 = pl.pallas_call(
        _make_conv1x1_kernel(c_in, c_out),
        out_shape=jax.ShapeDtypeStruct((n, c_out, hw), x_nchw.dtype),
        grid_spec=pltpu.PrefetchScalarGridSpec(
            num_scalar_prefetch=0,
            grid=grid,
            in_specs=[
                pl.BlockSpec(memory_space=pltpu.MemorySpace.SMEM),   # weight scalars
                pl.BlockSpec(memory_space=pltpu.MemorySpace.SMEM),   # bias scalars
                pl.BlockSpec((tile_n, c_in, tile_hw), lambda ni, ti: (ni, 0, ti)),
            ],
            out_specs=pl.BlockSpec((tile_n, c_out, tile_hw), lambda ni, ti: (ni, 0, ti)),
        ),
        compiler_params=pltpu.CompilerParams(
            dimension_semantics=("parallel", "parallel"),
            vmem_limit_bytes=32 * 1024 * 1024,   # blocks are small; safe on v5e/v6e/v7x
        ),
    )(w_mat, b_vec, x3)

    return out3.reshape(n, c_out, h, w)            # free reshape, no transpose


def reference_conv1x1(x_nchw, weight, bias):
    # Pure-JAX reference for correctness check.
    w_mat = weight.reshape(weight.shape[0], weight.shape[1])  # (C_out, C_in)
    y = jnp.einsum("nchw,oc->nohw", x_nchw, w_mat) + bias[None, :, None, None]
    return y.astype(x_nchw.dtype)


if __name__ == "__main__":
    key = jax.random.PRNGKey(0)
    k_x, k_b = jax.random.split(key)

    # Module shapes: Conv2d(3, 3, 1) -> weight (3, 3, 1, 1) forced to ones, bias (3,).
    n, c, h, w = 2, 3, 16, 16
    x = jax.random.normal(k_x, (n, c, h, w), dtype=jnp.float32)

    weight = jnp.ones((3, 3, 1, 1), dtype=jnp.float32)
    # Bias keeps PyTorch's default init; reproduce it deterministically here
    # (uniform in [-1/sqrt(fan_in), 1/sqrt(fan_in)], fan_in = 3).
    bound = 1.0 / jnp.sqrt(3.0)
    bias = jax.random.uniform(k_b, (3,), dtype=jnp.float32,
                              minval=-bound, maxval=bound)

    out = conv2d_1x1(x, weight, bias)
    out = jax.block_until_ready(out)

    ref = reference_conv1x1(x, weight, bias)
    assert out.shape == (n, c, h, w)
    assert jnp.allclose(out, ref, atol=1e-5, rtol=1e-5), "mismatch vs reference"

    print("KERNEL_OK")
</pallas_src>

<mosaic_0001>
module attributes {stable_mosaic.version = 11 : i64} {
  func.func @kernel(%arg0: i32, %arg1: i32, %arg2: memref<3x3xf32, #tpu.memory_space<smem>>, %arg3: memref<3xf32, #tpu.memory_space<smem>>, %arg4: memref<2x3x256xf32, #tpu.memory_space<vmem>>, %arg5: memref<2x3x256xf32, #tpu.memory_space<vmem>>) attributes {dimension_semantics = [#tpu.dimension_semantics<parallel>, #tpu.dimension_semantics<parallel>], iteration_bounds = array<i64: 1, 1>, scalar_prefetch = 0 : i64, scratch_operands = 0 : i64, tpu.core_type = #tpu.core_type<tc>, window_params = [{transform_indices = @transform_0, window_bounds = array<i64: 3, 3>}, {transform_indices = @transform_1, window_bounds = array<i64: 3>}, {transform_indices = @transform_2, window_bounds = array<i64: 2, 3, 256>}, {transform_indices = @transform_3, window_bounds = array<i64: 2, 3, 256>}]} {
    %c0 = arith.constant 0 : index
    %c0_0 = arith.constant 0 : index
    %c0_1 = arith.constant 0 : index
    %0 = vector.load %arg4[%c0, %c0_0, %c0_1] : memref<2x3x256xf32, #tpu.memory_space<vmem>>, vector<2x3x256xf32>
    %1 = vector.extract_strided_slice %0 {offsets = [0, 0, 0], sizes = [2, 1, 256], strides = [1, 1, 1]} : vector<2x3x256xf32> to vector<2x1x256xf32>
    %c0_2 = arith.constant 0 : index
    %c0_3 = arith.constant 0 : index
    %2 = memref.load %arg2[%c0_2, %c0_3] : memref<3x3xf32, #tpu.memory_space<smem>>
    %3 = vector.broadcast %2 : f32 to vector<2x1x256xf32>
    %4 = arith.mulf %1, %3 : vector<2x1x256xf32>
    %5 = vector.extract_strided_slice %0 {offsets = [0, 1, 0], sizes = [2, 1, 256], strides = [1, 1, 1]} : vector<2x3x256xf32> to vector<2x1x256xf32>
    %c0_4 = arith.constant 0 : index
    %c1 = arith.constant 1 : index
    %6 = memref.load %arg2[%c0_4, %c1] : memref<3x3xf32, #tpu.memory_space<smem>>
    %7 = vector.broadcast %6 : f32 to vector<2x1x256xf32>
    %8 = arith.mulf %5, %7 : vector<2x1x256xf32>
    %9 = arith.addf %4, %8 : vector<2x1x256xf32>
    %10 = vector.extract_strided_slice %0 {offsets = [0, 2, 0], sizes = [2, 1, 256], strides = [1, 1, 1]} : vector<2x3x256xf32> to vector<2x1x256xf32>
    %c0_5 = arith.constant 0 : index
    %c2 = arith.constant 2 : index
    %11 = memref.load %arg2[%c0_5, %c2] : memref<3x3xf32, #tpu.memory_space<smem>>
    %12 = vector.broadcast %11 : f32 to vector<2x1x256xf32>
    %13 = arith.mulf %10, %12 : vector<2x1x256xf32>
    %14 = arith.addf %9, %13 : vector<2x1x256xf32>
    %c0_6 = arith.constant 0 : index
    %15 = memref.load %arg3[%c0_6] : memref<3xf32, #tpu.memory_space<smem>>
    %16 = vector.broadcast %15 : f32 to vector<2x1x256xf32>
    %17 = arith.addf %14, %16 : vector<2x1x256xf32>
    %18 = vector.extract_strided_slice %0 {offsets = [0, 0, 0], sizes = [2, 1, 256], strides = [1, 1, 1]} : vector<2x3x256xf32> to vector<2x1x256xf32>
    %c1_7 = arith.constant 1 : index
    %c0_8 = arith.constant 0 : index
    %19 = memref.load %arg2[%c1_7, %c0_8] : memref<3x3xf32, #tpu.memory_space<smem>>
    %20 = vector.broadcast %19 : f32 to vector<2x1x256xf32>
    %21 = arith.mulf %18, %20 : vector<2x1x256xf32>
    %22 = vector.extract_strided_slice %0 {offsets = [0, 1, 0], sizes = [2, 1, 256], strides = [1, 1, 1]} : vector<2x3x256xf32> to vector<2x1x256xf32>
    %c1_9 = arith.constant 1 : index
    %c1_10 = arith.constant 1 : index
    %23 = memref.load %arg2[%c1_9, %c1_10] : memref<3x3xf32, #tpu.memory_space<smem>>
    %24 = vector.broadcast %23 : f32 to vector<2x1x256xf32>
    %25 = arith.mulf %22, %24 : vector<2x1x256xf32>
    %26 = arith.addf %21, %25 : vector<2x1x256xf32>
    %27 = vector.extract_strided_slice %0 {offsets = [0, 2, 0], sizes = [2, 1, 256], strides = [1, 1, 1]} : vector<2x3x256xf32> to vector<2x1x256xf32>
    %c1_11 = arith.constant 1 : index
    %c2_12 = arith.constant 2 : index
    %28 = memref.load %arg2[%c1_11, %c2_12] : memref<3x3xf32, #tpu.memory_space<smem>>
    %29 = vector.broadcast %28 : f32 to vector<2x1x256xf32>
    %30 = arith.mulf %27, %29 : vector<2x1x256xf32>
    %31 = arith.addf %26, %30 : vector<2x1x256xf32>
    %c1_13 = arith.constant 1 : index
    %32 = memref.load %arg3[%c1_13] : memref<3xf32, #tpu.memory_space<smem>>
    %33 = vector.broadcast %32 : f32 to vector<2x1x256xf32>
    %34 = arith.addf %31, %33 : vector<2x1x256xf32>
    %35 = vector.extract_strided_slice %0 {offsets = [0, 0, 0], sizes = [2, 1, 256], strides = [1, 1, 1]} : vector<2x3x256xf32> to vector<2x1x256xf32>
    %c2_14 = arith.constant 2 : index
    %c0_15 = arith.constant 0 : index
    %36 = memref.load %arg2[%c2_14, %c0_15] : memref<3x3xf32, #tpu.memory_space<smem>>
    %37 = vector.broadcast %36 : f32 to vector<2x1x256xf32>
    %38 = arith.mulf %35, %37 : vector<2x1x256xf32>
    %39 = vector.extract_strided_slice %0 {offsets = [0, 1, 0], sizes = [2, 1, 256], strides = [1, 1, 1]} : vector<2x3x256xf32> to vector<2x1x256xf32>
    %c2_16 = arith.constant 2 : index
    %c1_17 = arith.constant 1 : index
    %40 = memref.load %arg2[%c2_16, %c1_17] : memref<3x3xf32, #tpu.memory_space<smem>>
    %41 = vector.broadcast %40 : f32 to vector<2x1x256xf32>
    %42 = arith.mulf %39, %41 : vector<2x1x256xf32>
    %43 = arith.addf %38, %42 : vector<2x1x256xf32>
    %44 = vector.extract_strided_slice %0 {offsets = [0, 2, 0], sizes = [2, 1, 256], strides = [1, 1, 1]} : vector<2x3x256xf32> to vector<2x1x256xf32>
    %c2_18 = arith.constant 2 : index
    %c2_19 = arith.constant 2 : index
    %45 = memref.load %arg2[%c2_18, %c2_19] : memref<3x3xf32, #tpu.memory_space<smem>>
    %46 = vector.broadcast %45 : f32 to vector<2x1x256xf32>
    %47 = arith.mulf %44, %46 : vector<2x1x256xf32>
    %48 = arith.addf %43, %47 : vector<2x1x256xf32>
    %c2_20 = arith.constant 2 : index
    %49 = memref.load %arg3[%c2_20] : memref<3xf32, #tpu.memory_space<smem>>
    %50 = vector.broadcast %49 : f32 to vector<2x1x256xf32>
    %51 = arith.addf %48, %50 : vector<2x1x256xf32>
    %52 = tpu.concatenate %17, %34, %51 in 1 : vector<2x1x256xf32>, vector<2x1x256xf32>, vector<2x1x256xf32> -> vector<2x3x256xf32>
    %c0_21 = arith.constant 0 : index
    %c0_22 = arith.constant 0 : index
    %c0_23 = arith.constant 0 : index
    %53 = vector.load %arg5[%c0_21, %c0_22, %c0_23] : memref<2x3x256xf32, #tpu.memory_space<vmem>>, vector<2x3x256xf32>
    tpu.vector_store %arg5[%c0_21, %c0_22, %c0_23], %52 {strides = array<i32>} : memref<2x3x256xf32, #tpu.memory_space<vmem>>, vector<2x3x256xf32>,
    return
  }
  func.func @transform_0(%arg0: i32, %arg1: i32) -> (i32, i32) {
    %c0_i32 = arith.constant 0 : i32
    %c0_i32_0 = arith.constant 0 : i32
    %c0_i32_1 = arith.constant 0 : i32
    return %c0_i32, %c0_i32_0 : i32, i32
  }
  func.func @transform_1(%arg0: i32, %arg1: i32) -> i32 {
    %c0_i32 = arith.constant 0 : i32
    %c0_i32_0 = arith.constant 0 : i32
    return %c0_i32 : i32
  }
  func.func @transform_2(%arg0: i32, %arg1: i32) -> (i32, i32, i32) {
    %c0_i32 = arith.constant 0 : i32
    %c0_i32_0 = arith.constant 0 : i32
    return %arg0, %c0_i32, %arg1 : i32, i32, i32
  }
  func.func @transform_3(%arg0: i32, %arg1: i32) -> (i32, i32, i32) {
    %c0_i32 = arith.constant 0 : i32
    %c0_i32_0 = arith.constant 0 : i32
    return %arg0, %c0_i32, %arg1 : i32, i32, i32
  }
}

</mosaic_0001>

<llo_original>
// kernel: tpu_custom_call.1
$region0: #{tpu_custom_call.1}
  #allocation0 [shape = 'u32[]', space=smem, size = 0x4, offset = 0x4, fixed_abs, tag = 'smem constant byte address 0x4 - core index']
  #allocation1 [shape = 'u32[144,128]{1,0:T(1,128)}', space=vmem, size = 0x12000, scoped, tag = 'internal scratch']
  %s0 = inlined_call_operand.vmem [shape: f32[3,3], index: 0, kind: input, shape index: {}]
  %s1 = inlined_call_operand.vmem [shape: f32[3], index: 1, kind: input, shape index: {}]
  %s2 = inlined_call_operand.vmem [shape: f32[2,3,256], index: 2, kind: input, shape index: {}]
  %s3 = inlined_call_operand.vmem [shape: f32[2,3,256], index: 3, kind: output, shape index: {}]
  %s4 = sld [smem:[#allocation0]]
  $region30: #{tpu_custom_call.1} parent=0
    _
  %s6 = ssub.s32 1, %s4
  %s7 = scalar_select 0, %s6, %s4
  $region1: #{tpu_custom_call.1} parent=0
    #allocation2 [shape = 'u8[2048]{0}', space=smem, size = 0x800, scoped, tag = 'input window, operand 0, single buffered']
    #allocation3 [shape = 's32[1]{0}', space=sflag, size = 0x4, scoped, tag = 'scoped memory for tpu_custom_call.1']
    #allocation4 [shape = 'u8[512]{0}', space=smem, size = 0x200, scoped, tag = 'input window, operand 1, single buffered']
    #allocation5 [shape = 's32[1]{0}', space=sflag, size = 0x4, scoped, tag = 'scoped memory for tpu_custom_call.1']
    %8 = vsyncpa [#allocation3], 0
    %9 = vsyncpa [#allocation5], 0
    // Predicated region
    $region2: #{tpu_custom_call.1} parent=1 // pred_check
      _
    $region3: #{tpu_custom_call.1} parent=1 // pred_check_branch
      %11 = sbr.rel (0) target = $region5
    $region4: #{tpu_custom_call.1} parent=1 // pred_region
      %s13 = ssub.s32 64, 64
      %14 = vsyncadd [#allocation3], %s13
      %s16 = sshll.u32 %s0, 4
      %s17 = int_to_ptr.vmem [resolvable:$true] %s16
      %19 = dma.vmem_to_smem %s17, 64, [#allocation2], [#allocation3]
    $region5: #{tpu_custom_call.1} parent=1 // pred_fallthru
      _
    // Predicated region
    $region6: #{tpu_custom_call.1} parent=1 // pred_check
      _
    $region7: #{tpu_custom_call.1} parent=1 // pred_check_branch
      %21 = sbr.rel (0) target = $region9
    $region8: #{tpu_custom_call.1} parent=1 // pred_region
      %s23 = ssub.s32 16, 16
      %24 = vsyncadd [#allocation5], %s23
      %s26 = sshll.u32 %s1, 4
      %s27 = int_to_ptr.vmem [resolvable:$true] %s26
      %29 = dma.vmem_to_smem %s27, 16, [#allocation4], [#allocation5]
    $region9: #{tpu_custom_call.1} parent=1 // pred_fallthru
      _
    // Predicated region
    $region10: #{tpu_custom_call.1} parent=1 // pred_check
      _
    $region11: #{tpu_custom_call.1} parent=1 // pred_check_branch
      %31 = sbr.rel (0) target = $region13
    $region12: #{tpu_custom_call.1} parent=1 // pred_region
      _
    $region13: #{tpu_custom_call.1} parent=1 // pred_fallthru
      _
    // Predicated region
    $region14: #{tpu_custom_call.1} parent=1 // pred_check
      _
    $region15: #{tpu_custom_call.1} parent=1 // pred_check_branch
      %33 = sbr.rel (0) target = $region17
    $region16: #{tpu_custom_call.1} parent=1 // pred_region
      %34 = dma.done [#allocation3], 64
    $region17: #{tpu_custom_call.1} parent=1 // pred_fallthru
      _
    // Predicated region
    $region18: #{tpu_custom_call.1} parent=1 // pred_check
      _
    $region19: #{tpu_custom_call.1} parent=1 // pred_check_branch
      %36 = sbr.rel (0) target = $region21
    $region20: #{tpu_custom_call.1} parent=1 // pred_region
      %37 = dma.done [#allocation5], 16
    $region21: #{tpu_custom_call.1} parent=1 // pred_fallthru
      _
    %38 = sfence
    %v39 = vld [vmem:[%s2] sm:$0x77]
    %v40 = vld [vmem:[%s2 + $0x8] sm:$0x77]
    %s41 = sld [smem:[#allocation2]]
    %v42 = vstv %s41
    %v43 = vmul.f32 %v39, %v42
    %v44 = vmul.f32 %v40, %v42
    %s45 = sld [smem:[#allocation2 + $0x1]]
    %v46 = vstv %s45
    %v47 = vmul.f32 %v39, %v46
    %v48 = vmul.f32 %v40, %v46
    %v51 = vrot.slane %v47, 5
    %v52 = vrot.slane %v51, 4
    %v53 = vrot.slane %v48, 5
    %v54 = vrot.slane %v53, 4
    %v57 = vadd.f32 %v43, %v52
    %v58 = vadd.f32 %v44, %v54
    %s59 = sld [smem:[#allocation2 + $0x2]]
    %v60 = vstv %s59
    %v61 = vmul.f32 %v39, %v60
    %v62 = vmul.f32 %v40, %v60
    %v65 = vrot.slane %v61, 6
    %v66 = vrot.slane %v65, 4
    %v67 = vrot.slane %v62, 6
    %v68 = vrot.slane %v67, 4
    %v71 = vadd.f32 %v57, %v66
    %v72 = vadd.f32 %v58, %v68
    %s73 = sld [smem:[#allocation4]]
    %v74 = vstv %s73
    %v75 = vadd.f32 %v71, %v74
    %v76 = vadd.f32 %v72, %v74
    %s77 = sld [smem:[#allocation2 + $0x80]]
    %v78 = vstv %s77
    %v79 = vmul.f32 %v39, %v78
    %v80 = vmul.f32 %v40, %v78
    %s81 = sld [smem:[#allocation2 + $0x81]]
    %v82 = vstv %s81
    %v83 = vmul.f32 %v39, %v82
    %v84 = vmul.f32 %v40, %v82
    %v87 = vrot.slane %v83, 5
    %v88 = vrot.slane %v87, 4
    %v89 = vrot.slane %v84, 5
    %v90 = vrot.slane %v89, 4
    %v93 = vadd.f32 %v79, %v88
    %v94 = vadd.f32 %v80, %v90
    %s95 = sld [smem:[#allocation2 + $0x82]]
    %v96 = vstv %s95
    %v97 = vmul.f32 %v39, %v96
    %v98 = vmul.f32 %v40, %v96
    %v101 = vrot.slane %v97, 6
    %v102 = vrot.slane %v101, 4
    %v103 = vrot.slane %v98, 6
    %v104 = vrot.slane %v103, 4
    %v107 = vadd.f32 %v93, %v102
    %v108 = vadd.f32 %v94, %v104
    %s109 = sld [smem:[#allocation4 + $0x1]]
    %v110 = vstv %s109
    %v111 = vadd.f32 %v107, %v110
    %v112 = vadd.f32 %v108, %v110
    %s113 = sld [smem:[#allocation2 + $0x100]]
    %v114 = vstv %s113
    %v115 = vmul.f32 %v39, %v114
    %v116 = vmul.f32 %v40, %v114
    %s117 = sld [smem:[#allocation2 + $0x101]]
    %v118 = vstv %s117
    %v119 = vmul.f32 %v39, %v118
    %v120 = vmul.f32 %v40, %v118
    %v123 = vrot.slane %v119, 5
    %v124 = vrot.slane %v123, 4
    %v125 = vrot.slane %v120, 5
    %v126 = vrot.slane %v125, 4
    %v129 = vadd.f32 %v115, %v124
    %v130 = vadd.f32 %v116, %v126
    %s131 = sld [smem:[#allocation2 + $0x102]]
    %v132 = vstv %s131
    %v133 = vmul.f32 %v39, %v132
    %v134 = vmul.f32 %v40, %v132
    %v137 = vrot.slane %v133, 6
    %v138 = vrot.slane %v137, 4
    %v139 = vrot.slane %v134, 6
    %v140 = vrot.slane %v139, 4
    %v143 = vadd.f32 %v129, %v138
    %v144 = vadd.f32 %v130, %v140
    %s145 = sld [smem:[#allocation4 + $0x2]]
    %v146 = vstv %s145
    %v147 = vadd.f32 %v143, %v146
    %v148 = vadd.f32 %v144, %v146
    %v151 = vlaneseq
    %v152 = vshrl.u32 %v151, 7
    %v153 = vsub.s32 0, %v152
    %v154 = vrot.slane %v75, %v153
    %v155 = vlaneseq
    %v156 = vshrl.u32 %v155, 7
    %v157 = vsub.s32 4, %v156
    %v158 = vrot.slane %v75, %v157
    %v159 = vlaneseq
    %v160 = vshrl.u32 %v159, 7
    %v161 = vsub.s32 0, %v160
    %v162 = vrot.slane %v76, %v161
    %v163 = vlaneseq
    %v164 = vshrl.u32 %v163, 7
    %v165 = vsub.s32 4, %v164
    %v166 = vrot.slane %v76, %v165
    %v173 = vlaneseq
    %v174 = vshrl.u32 %v173, 7
    %v175 = vsub.s32 0, %v174
    %v176 = vrot.slane %v111, %v175
    %v177 = vlaneseq
    %v178 = vshrl.u32 %v177, 7
    %v179 = vsub.s32 4, %v178
    %v180 = vrot.slane %v111, %v179
    %v181 = vlaneseq
    %v182 = vshrl.u32 %v181, 7
    %v183 = vsub.s32 0, %v182
    %v184 = vrot.slane %v112, %v183
    %v185 = vlaneseq
    %v186 = vshrl.u32 %v185, 7
    %v187 = vsub.s32 4, %v186
    %v188 = vrot.slane %v112, %v187
    %v195 = vlaneseq
    %v196 = vshrl.u32 %v195, 7
    %v197 = vsub.s32 0, %v196
    %v198 = vrot.slane %v147, %v197
    %v199 = vlaneseq
    %v200 = vshrl.u32 %v199, 7
    %v201 = vsub.s32 4, %v200
    %v202 = vrot.slane %v147, %v201
    %v203 = vlaneseq
    %v204 = vshrl.u32 %v203, 7
    %v205 = vsub.s32 0, %v204
    %v206 = vrot.slane %v148, %v205
    %v207 = vlaneseq
    %v208 = vshrl.u32 %v207, 7
    %v209 = vsub.s32 4, %v208
    %v210 = vrot.slane %v148, %v209
    %vm215 = vcmask 1040384
    %v216 = vsel %vm215, %v154, %v176
    %v217 = vsel %vm215, %v158, %v180
    %v218 = vsel %vm215, %v162, %v184
    %v219 = vsel %vm215, %v166, %v188
    %vm220 = vcmask 1041408
    %v221 = vsel %vm220, %v216, %v198
    %v222 = vsel %vm220, %v217, %v202
    %v223 = vsel %vm220, %v218, %v206
    %v224 = vsel %vm220, %v219, %v210
    %v229 = vcombine.low %v221, %v222
    %v230 = vcombine.low %v223, %v224
    %233 = vst [vmem:[%s3] sm:$0x77] %v229
    %234 = vst [vmem:[%s3 + $0x8] sm:$0x77] %v230
    // Predicated region
    $region22: #{tpu_custom_call.1} parent=1 // pred_check
      _
    $region23: #{tpu_custom_call.1} parent=1 // pred_check_branch
      %236 = sbr.rel (0) target = $region25
    $region24: #{tpu_custom_call.1} parent=1 // pred_region
      _
    $region25: #{tpu_custom_call.1} parent=1 // pred_fallthru
      _
    // Predicated region
    $region26: #{tpu_custom_call.1} parent=1 // pred_check
      _
    $region27: #{tpu_custom_call.1} parent=1 // pred_check_branch
      %238 = sbr.rel (0) target = $region29
    $region28: #{tpu_custom_call.1} parent=1 // pred_region
      _
    $region29: #{tpu_custom_call.1} parent=1 // pred_fallthru
      _
    %239 = vsyncpa [#allocation3], 1
    %240 = vsyncpa [#allocation5], 1

</llo_original>
